<compile_context>
chip_gen: v7x
topology: tpu7x:2x2x1
jax: 0.10.0
libtpu: 0.0.40
codegen_flags: <defaults>
</compile_context>

<pallas_src>
from functools import partial

import jax
import jax.numpy as jnp
from jax.experimental import pallas as pl
from jax.experimental.pallas import tpu as pltpu


LN_EPS = 1e-5
_INV_SQRT2 = 0.7071067811865476

# (name, out_dim) for the six ESM3 output heads, in a fixed order.
HEAD_SPECS = (
    ("sequence", 64),
    ("structure", 4096),
    ("ss8", 8 + 3),
    ("sasa", 16 + 3),
    ("function", 260 * 8),
    ("residue", 1478),
)

_OUTPUT_KEY = {
    "sequence": "sequence_logits",
    "structure": "structure_logits",
    "ss8": "secondary_structure_logits",
    "sasa": "sasa_logits",
    "function": "function_logits",
    "residue": "residue_logits",
}


def _round_up(x, m):
    return (x + m - 1) // m * m


# ---------------------------------------------------------------------------
# Fused kernel
# ---------------------------------------------------------------------------
def _fused_heads_kernel(head_ref, new_head_ref,                  # scalar prefetch
                        x_ref, w1_ref, b1_ref, g_ref, beta_ref,  # inputs
                        w2_ref, b2_ref,
                        o_ref,                                   # output
                        hn_ref):                                 # VMEM scratch
    """One grid step = (token tile i, output-column tile j).

    The hidden activation depends only on (token tile, head); it is cached in
    hn_ref and recomputed only when out-tile j starts a new head.  new_head[0]
    is 1, which also covers the start of every token-tile sweep.
    """
    del head_ref  # consumed only by the index maps
    j = pl.program_id(1)

    @pl.when(new_head_ref[j] == 1)
    def _recompute_hidden():
        # Linear 1: bf16 x bf16 -> f32 accumulation on the MXU.
        h = jnp.dot(x_ref[...], w1_ref[...],
                    preferred_element_type=jnp.float32) + b1_ref[...]
        # Exact (erf) GELU, matching torch.nn.GELU() default.
        h = 0.5 * h * (1.0 + jax.lax.erf(h * _INV_SQRT2))
        # Single-pass LayerNorm over the feature (lane) axis.
        mu = jnp.mean(h, axis=-1, keepdims=True)
        msq = jnp.mean(h * h, axis=-1, keepdims=True)
        var = jnp.maximum(msq - mu * mu, 0.0)
        hn = (h - mu) * jax.lax.rsqrt(var + LN_EPS)
        hn = hn * g_ref[...] + beta_ref[...]
        hn_ref[...] = hn.astype(hn_ref.dtype)

    # Linear 2 for this head's 256-wide column tile (lane-dense store).
    out = jnp.dot(hn_ref[...], w2_ref[...],
                  preferred_element_type=jnp.float32) + b2_ref[...]
    o_ref[...] = out.astype(o_ref.dtype)


def _fused_heads_call(x_pad, packed, *, tm, tn, total_pad):
    n_pad, d = x_pad.shape
    grid = (n_pad // tm, total_pad // tn)

    return pl.pallas_call(
        _fused_heads_kernel,
        out_shape=jax.ShapeDtypeStruct((n_pad, total_pad), jnp.float32),
        grid_spec=pltpu.PrefetchScalarGridSpec(
            num_scalar_prefetch=2,
            grid=grid,
            in_specs=[
                # x tile: index constant across the inner (out-tile) axis, so
                # it stays resident and is DMA'd once per token tile.
                pl.BlockSpec((tm, d), lambda i, j, ht, nh: (i, 0)),
                # Per-head parameters, indexed by the scalar-prefetched head
                # id of the current out-tile (re-fetched only at head change).
                pl.BlockSpec((None, d, d), lambda i, j, ht, nh: (ht[j], 0, 0)),
                pl.BlockSpec((None, 1, d), lambda i, j, ht, nh: (ht[j], 0, 0)),
                pl.BlockSpec((None, 1, d), lambda i, j, ht, nh: (ht[j], 0, 0)),
                pl.BlockSpec((None, 1, d), lambda i, j, ht, nh: (ht[j], 0, 0)),
                # Concatenated second-linear weights/bias, tiled over lanes.
                pl.BlockSpec((d, tn), lambda i, j, ht, nh: (0, j)),
                pl.BlockSpec((1, tn), lambda i, j, ht, nh: (0, j)),
            ],
            out_specs=pl.BlockSpec((tm, tn), lambda i, j, ht, nh: (i, j)),
            scratch_shapes=[pltpu.VMEM((tm, d), jnp.bfloat16)],
        ),
        compiler_params=pltpu.CompilerParams(
            dimension_semantics=("parallel", "arbitrary"),
            vmem_limit_bytes=48 * 1024 * 1024,
        ),
    )(packed["head_of_tile"], packed["new_head"],
      x_pad, packed["w1"], packed["b1"], packed["gamma"], packed["beta"],
      packed["w2"], packed["b2"])


# ---------------------------------------------------------------------------
# Parameters: init + packing for the fused kernel
# ---------------------------------------------------------------------------
def init_head_params(key, d_model, out_dim):
    ks = jax.random.split(key, 6)
    scale = d_model ** -0.5
    return {
        "w1": (scale * jax.random.normal(ks[0], (d_model, d_model), jnp.float32)
               ).astype(jnp.bfloat16),
        "b1": 0.1 * jax.random.normal(ks[1], (1, d_model), jnp.float32),
        "gamma": 1.0 + 0.1 * jax.random.normal(ks[2], (1, d_model), jnp.float32),
        "beta": 0.1 * jax.random.normal(ks[3], (1, d_model), jnp.float32),
        "w2": (scale * jax.random.normal(ks[4], (d_model, out_dim), jnp.float32)
               ).astype(jnp.bfloat16),
        "b2": 0.1 * jax.random.normal(ks[5], (1, out_dim), jnp.float32),
    }


def init_output_heads_params(key, d_model):
    return {name: init_head_params(jax.random.fold_in(key, i), d_model, odim)
            for i, (name, odim) in enumerate(HEAD_SPECS)}


def pack_output_head_params(params, *, tn=256):
    """Stack / concatenate per-head weights for the fused kernel.

    Returns (packed tensor dict, static meta tuple of (name, start, out_dim),
    total lane-padded output width).
    """
    names = [n for n, _ in HEAD_SPECS]
    packed = {
        "w1": jnp.stack([params[n]["w1"] for n in names]),         # [H,d,d] bf16
        "b1": jnp.stack([params[n]["b1"] for n in names]),         # [H,1,d] f32
        "gamma": jnp.stack([params[n]["gamma"] for n in names]),   # [H,1,d] f32
        "beta": jnp.stack([params[n]["beta"] for n in names]),     # [H,1,d] f32
    }
    w2_blocks, b2_blocks = [], []
    head_of_tile, new_head, meta = [], [], []
    start = 0
    for h, (name, odim) in enumerate(HEAD_SPECS):
        pad_w = _round_up(odim, tn)
        w2_blocks.append(jnp.pad(params[name]["w2"], ((0, 0), (0, pad_w - odim))))
        b2_blocks.append(jnp.pad(params[name]["b2"], ((0, 0), (0, pad_w - odim))))
        n_tiles = pad_w // tn
        head_of_tile += [h] * n_tiles
        new_head += [1] + [0] * (n_tiles - 1)
        meta.append((name, start, odim))
        start += pad_w
    packed["w2"] = jnp.concatenate(w2_blocks, axis=1)              # [d,total] bf16
    packed["b2"] = jnp.concatenate(b2_blocks, axis=1)              # [1,total] f32
    packed["head_of_tile"] = jnp.asarray(head_of_tile, jnp.int32)
    packed["new_head"] = jnp.asarray(new_head, jnp.int32)
    return packed, tuple(meta), start


# ---------------------------------------------------------------------------
# Forward (mimics OutputHeads.forward -> ESMOutput)
# ---------------------------------------------------------------------------
@partial(jax.jit, static_argnames=("meta", "total_pad", "tm_max", "tn"))
def output_heads_forward(packed, x, embed, *, meta, total_pad, tm_max=256, tn=256):
    """x: [B, L, D], embed: [B, L, E] -> dict mimicking ESMOutput."""
    b, l, d = x.shape
    n = b * l
    x2d = x.reshape(n, d).astype(jnp.bfloat16)

    tm = min(tm_max, _round_up(n, 8))
    n_pad = _round_up(n, tm)
    if n_pad != n:
        x2d = jnp.pad(x2d, ((0, n_pad - n), (0, 0)))

    logits = _fused_heads_call(x2d, packed, tm=tm, tn=tn, total_pad=total_pad)

    out = {}
    for name, start, odim in meta:
        v = logits[:n, start:start + odim].reshape(b, l, odim)
        if name == "function":
            # einops '... (k v) -> ... k v' with k=8 (k is the outer factor)
            v = v.reshape(b, l, 8, odim // 8)
        out[_OUTPUT_KEY[name]] = v
    out["embeddings"] = embed  # passed through untouched, as in the PyTorch module
    return out


# ---------------------------------------------------------------------------
# Pure-JAX reference (same mixed precision as the kernel)
# ---------------------------------------------------------------------------
def _reference_head(x2d, p):
    xf = x2d.astype(jnp.bfloat16).astype(jnp.float32)
    h = xf @ p["w1"].astype(jnp.float32) + p["b1"]
    h = 0.5 * h * (1.0 + jax.lax.erf(h * _INV_SQRT2))
    mu = h.mean(-1, keepdims=True)
    var = ((h - mu) ** 2).mean(-1, keepdims=True)
    hn = (h - mu) / jnp.sqrt(var + LN_EPS) * p["gamma"] + p["beta"]
    hn = hn.astype(jnp.bfloat16).astype(jnp.float32)
    return hn @ p["w2"].astype(jnp.float32) + p["b2"]


if __name__ == "__main__":
    d_model = 32
    batch, seq = 2, 8

    key = jax.random.PRNGKey(0)
    kx, ke, kp = jax.random.split(key, 3)
    x = jax.random.normal(kx, (batch, seq, d_model), jnp.float32)
    embed = jax.random.normal(ke, (batch, seq, d_model), jnp.float32)

    params = init_output_heads_params(kp, d_model)
    packed, meta, total_pad = pack_output_head_params(params, tn=256)

    out = output_heads_forward(packed, x, embed, meta=meta, total_pad=total_pad)
    jax.block_until_ready(out)

    # shape checks against the PyTorch module's semantics
    assert out["sequence_logits"].shape == (batch, seq, 64)
    assert out["structure_logits"].shape == (batch, seq, 4096)
    assert out["secondary_structure_logits"].shape == (batch, seq, 11)
    assert out["sasa_logits"].shape == (batch, seq, 19)
    assert out["function_logits"].shape == (batch, seq, 8, 260)
    assert out["residue_logits"].shape == (batch, seq, 1478)
    assert out["embeddings"].shape == embed.shape

    # numerical checks of every head against the pure-JAX reference
    x2d = x.reshape(-1, d_model)
    for name in ("sequence", "structure", "ss8", "sasa", "residue"):
        ref = _reference_head(x2d, params[name]).reshape(batch, seq, -1)
        got = out[_OUTPUT_KEY[name]]
        assert jnp.allclose(got, ref, atol=2e-3, rtol=2e-3), name
    ref_f = _reference_head(x2d, params["function"]).reshape(batch, seq, 8, 260)
    assert jnp.allclose(out["function_logits"], ref_f, atol=2e-3, rtol=2e-3)

    print("KERNEL_OK")
</pallas_src>

<mosaic_0001>
module attributes {stable_mosaic.version = 11 : i64} {
  func.func @_fused_heads_kernel(%arg0: i32, %arg1: i32, %arg2: memref<34xi32, #tpu.memory_space<smem>>, %arg3: memref<34xi32, #tpu.memory_space<smem>>, %arg4: memref<16x32xbf16, #tpu.memory_space<vmem>>, %arg5: memref<1x32x32xbf16, #tpu.memory_space<vmem>>, %arg6: memref<1x1x32xf32, #tpu.memory_space<vmem>>, %arg7: memref<1x1x32xf32, #tpu.memory_space<vmem>>, %arg8: memref<1x1x32xf32, #tpu.memory_space<vmem>>, %arg9: memref<32x256xbf16, #tpu.memory_space<vmem>>, %arg10: memref<1x256xf32, #tpu.memory_space<vmem>>, %arg11: memref<16x256xf32, #tpu.memory_space<vmem>>, %arg12: memref<16x32xbf16, #tpu.memory_space<vmem>>) attributes {dimension_semantics = [#tpu.dimension_semantics<parallel>, #tpu.dimension_semantics<arbitrary>], iteration_bounds = array<i64: 1, 34>, scalar_prefetch = 2 : i64, scratch_operands = 1 : i64, tpu.core_type = #tpu.core_type<tc>, window_params = [{transform_indices = @transform_0, window_bounds = array<i64: 16, 32>}, {transform_indices = @transform_1, window_bounds = array<i64: 1, 32, 32>}, {transform_indices = @transform_2, window_bounds = array<i64: 1, 1, 32>}, {transform_indices = @transform_3, window_bounds = array<i64: 1, 1, 32>}, {transform_indices = @transform_4, window_bounds = array<i64: 1, 1, 32>}, {transform_indices = @transform_5, window_bounds = array<i64: 32, 256>}, {transform_indices = @transform_6, window_bounds = array<i64: 1, 256>}, {transform_indices = @transform_7, window_bounds = array<i64: 16, 256>}]} {
    %0 = arith.index_cast %arg1 : i32 to index
    %1 = memref.load %arg3[%0] : memref<34xi32, #tpu.memory_space<smem>>
    %c1_i32 = arith.constant 1 : i32
    %2 = arith.cmpi eq, %1, %c1_i32 : i32
    %3 = arith.extui %2 : i1 to i32
    %c0_i32 = arith.constant 0 : i32
    %4 = arith.cmpi ne, %3, %c0_i32 : i32
    scf.if %4 {
      %c0_7 = arith.constant 0 : index
      %c0_8 = arith.constant 0 : index
      %12 = vector.load %arg4[%c0_7, %c0_8] : memref<16x32xbf16, #tpu.memory_space<vmem>>, vector<16x32xbf16>
      %c0_9 = arith.constant 0 : index
      %c0_10 = arith.constant 0 : index
      %c0_11 = arith.constant 0 : index
      %13 = vector.load %arg5[%c0_9, %c0_10, %c0_11] : memref<1x32x32xbf16, #tpu.memory_space<vmem>>, vector<1x32x32xbf16>
      %14 = vector.shape_cast %13 : vector<1x32x32xbf16> to vector<32x32xbf16>
      %cst_12 = arith.constant dense<0.000000e+00> : vector<16x32xf32>
      %15 = tpu.matmul %12, %14, %cst_12 {dimension_numbers = #tpu.dot_dimension_numbers<[1], [0], [0], [1], [0, 0, 1, 1], [], []>} : vector<16x32xbf16>, vector<32x32xbf16>, vector<16x32xf32> -> vector<16x32xf32>
      %c0_13 = arith.constant 0 : index
      %c0_14 = arith.constant 0 : index
      %c0_15 = arith.constant 0 : index
      %16 = vector.load %arg6[%c0_13, %c0_14, %c0_15] : memref<1x1x32xf32, #tpu.memory_space<vmem>>, vector<1x1x32xf32>
      %17 = vector.shape_cast %16 : vector<1x1x32xf32> to vector<1x32xf32>
      %18 = vector.broadcast %17 : vector<1x32xf32> to vector<16x32xf32>
      %19 = arith.addf %15, %18 : vector<16x32xf32>
      %cst_16 = arith.constant 5.000000e-01 : f32
      %20 = vector.broadcast %cst_16 : f32 to vector<16x32xf32>
      %21 = arith.mulf %20, %19 : vector<16x32xf32>
      %cst_17 = arith.constant 0.707106769 : f32
      %22 = vector.broadcast %cst_17 : f32 to vector<16x32xf32>
      %23 = arith.mulf %19, %22 : vector<16x32xf32>
      %24 = math.erf %23 : vector<16x32xf32>
      %cst_18 = arith.constant 1.000000e+00 : f32
      %25 = vector.broadcast %cst_18 : f32 to vector<16x32xf32>
      %26 = arith.addf %25, %24 : vector<16x32xf32>
      %27 = arith.mulf %21, %26 : vector<16x32xf32>
      %cst_19 = arith.constant dense<0.000000e+00> : vector<16xf32>
      %28 = vector.multi_reduction <add>, %27, %cst_19 [1] : vector<16x32xf32> to vector<16xf32>
      %29 = vector.shape_cast %28 : vector<16xf32> to vector<16x1xf32>
      %cst_20 = arith.constant 3.200000e+01 : f32
      %30 = vector.broadcast %cst_20 : f32 to vector<16x1xf32>
      %31 = arith.divf %29, %30 : vector<16x1xf32>
      %32 = arith.mulf %27, %27 : vector<16x32xf32>
      %cst_21 = arith.constant dense<0.000000e+00> : vector<16xf32>
      %33 = vector.multi_reduction <add>, %32, %cst_21 [1] : vector<16x32xf32> to vector<16xf32>
      %34 = vector.shape_cast %33 : vector<16xf32> to vector<16x1xf32>
      %cst_22 = arith.constant 3.200000e+01 : f32
      %35 = vector.broadcast %cst_22 : f32 to vector<16x1xf32>
      %36 = arith.divf %34, %35 : vector<16x1xf32>
      %37 = arith.mulf %31, %31 : vector<16x1xf32>
      %38 = arith.subf %36, %37 : vector<16x1xf32>
      %cst_23 = arith.constant 0.000000e+00 : f32
      %39 = vector.broadcast %cst_23 : f32 to vector<16x1xf32>
      %40 = arith.maximumf %38, %39 : vector<16x1xf32>
      %41 = vector.broadcast %31 : vector<16x1xf32> to vector<16x32xf32>
      %42 = arith.subf %27, %41 : vector<16x32xf32>
      %cst_24 = arith.constant 9.99999974E-6 : f32
      %43 = vector.broadcast %cst_24 : f32 to vector<16x1xf32>
      %44 = arith.addf %40, %43 : vector<16x1xf32>
      %45 = math.rsqrt %44 : vector<16x1xf32>
      %46 = vector.broadcast %45 : vector<16x1xf32> to vector<16x32xf32>
      %47 = arith.mulf %42, %46 : vector<16x32xf32>
      %c0_25 = arith.constant 0 : index
      %c0_26 = arith.constant 0 : index
      %c0_27 = arith.constant 0 : index
      %48 = vector.load %arg7[%c0_25, %c0_26, %c0_27] : memref<1x1x32xf32, #tpu.memory_space<vmem>>, vector<1x1x32xf32>
      %49 = vector.shape_cast %48 : vector<1x1x32xf32> to vector<1x32xf32>
      %50 = vector.broadcast %49 : vector<1x32xf32> to vector<16x32xf32>
      %51 = arith.mulf %47, %50 : vector<16x32xf32>
      %c0_28 = arith.constant 0 : index
      %c0_29 = arith.constant 0 : index
      %c0_30 = arith.constant 0 : index
      %52 = vector.load %arg8[%c0_28, %c0_29, %c0_30] : memref<1x1x32xf32, #tpu.memory_space<vmem>>, vector<1x1x32xf32>
      %53 = vector.shape_cast %52 : vector<1x1x32xf32> to vector<1x32xf32>
      %54 = vector.broadcast %53 : vector<1x32xf32> to vector<16x32xf32>
      %55 = arith.addf %51, %54 : vector<16x32xf32>
      %56 = arith.truncf %55 : vector<16x32xf32> to vector<16x32xbf16>
      %c0_31 = arith.constant 0 : index
      %c0_32 = arith.constant 0 : index
      %57 = vector.load %arg12[%c0_31, %c0_32] : memref<16x32xbf16, #tpu.memory_space<vmem>>, vector<16x32xbf16>
      tpu.vector_store %arg12[%c0_31, %c0_32], %56 {strides = array<i32>} : memref<16x32xbf16, #tpu.memory_space<vmem>>, vector<16x32xbf16>,
    } else {
    }
    %c0 = arith.constant 0 : index
    %c0_0 = arith.constant 0 : index
    %5 = vector.load %arg12[%c0, %c0_0] : memref<16x32xbf16, #tpu.memory_space<vmem>>, vector<16x32xbf16>
    %c0_1 = arith.constant 0 : index
    %c0_2 = arith.constant 0 : index
    %6 = vector.load %arg9[%c0_1, %c0_2] : memref<32x256xbf16, #tpu.memory_space<vmem>>, vector<32x256xbf16>
    %cst = arith.constant dense<0.000000e+00> : vector<16x256xf32>
    %7 = tpu.matmul %5, %6, %cst {dimension_numbers = #tpu.dot_dimension_numbers<[1], [0], [0], [1], [0, 0, 1, 1], [], []>} : vector<16x32xbf16>, vector<32x256xbf16>, vector<16x256xf32> -> vector<16x256xf32>
    %c0_3 = arith.constant 0 : index
    %c0_4 = arith.constant 0 : index
    %8 = vector.load %arg10[%c0_3, %c0_4] : memref<1x256xf32, #tpu.memory_space<vmem>>, vector<1x256xf32>
    %9 = vector.broadcast %8 : vector<1x256xf32> to vector<16x256xf32>
    %10 = arith.addf %7, %9 : vector<16x256xf32>
    %c0_5 = arith.constant 0 : index
    %c0_6 = arith.constant 0 : index
    %11 = vector.load %arg11[%c0_5, %c0_6] : memref<16x256xf32, #tpu.memory_space<vmem>>, vector<16x256xf32>
    tpu.vector_store %arg11[%c0_5, %c0_6], %10 {strides = array<i32>} : memref<16x256xf32, #tpu.memory_space<vmem>>, vector<16x256xf32>,
    return
  }
  func.func @transform_0(%arg0: i32, %arg1: i32, %arg2: memref<34xi32, #tpu.memory_space<smem>>, %arg3: memref<34xi32, #tpu.memory_space<smem>>) -> (i32, i32) {
    %c0_i32 = arith.constant 0 : i32
    %c0_i32_0 = arith.constant 0 : i32
    return %arg0, %c0_i32 : i32, i32
  }
  func.func @transform_1(%arg0: i32, %arg1: i32, %arg2: memref<34xi32, #tpu.memory_space<smem>>, %arg3: memref<34xi32, #tpu.memory_space<smem>>) -> (i32, i32, i32) {
    %0 = arith.index_cast %arg1 : i32 to index
    %1 = memref.load %arg2[%0] : memref<34xi32, #tpu.memory_space<smem>>
    %c0_i32 = arith.constant 0 : i32
    %c0_i32_0 = arith.constant 0 : i32
    %c0_i32_1 = arith.constant 0 : i32
    return %1, %c0_i32, %c0_i32_0 : i32, i32, i32
  }
  func.func @transform_2(%arg0: i32, %arg1: i32, %arg2: memref<34xi32, #tpu.memory_space<smem>>, %arg3: memref<34xi32, #tpu.memory_space<smem>>) -> (i32, i32, i32) {
    %0 = arith.index_cast %arg1 : i32 to index
    %1 = memref.load %arg2[%0] : memref<34xi32, #tpu.memory_space<smem>>
    %c0_i32 = arith.constant 0 : i32
    %c0_i32_0 = arith.constant 0 : i32
    %c0_i32_1 = arith.constant 0 : i32
    return %1, %c0_i32, %c0_i32_0 : i32, i32, i32
  }
  func.func @transform_3(%arg0: i32, %arg1: i32, %arg2: memref<34xi32, #tpu.memory_space<smem>>, %arg3: memref<34xi32, #tpu.memory_space<smem>>) -> (i32, i32, i32) {
    %0 = arith.index_cast %arg1 : i32 to index
    %1 = memref.load %arg2[%0] : memref<34xi32, #tpu.memory_space<smem>>
    %c0_i32 = arith.constant 0 : i32
    %c0_i32_0 = arith.constant 0 : i32
    %c0_i32_1 = arith.constant 0 : i32
    return %1, %c0_i32, %c0_i32_0 : i32, i32, i32
  }
  func.func @transform_4(%arg0: i32, %arg1: i32, %arg2: memref<34xi32, #tpu.memory_space<smem>>, %arg3: memref<34xi32, #tpu.memory_space<smem>>) -> (i32, i32, i32) {
    %0 = arith.index_cast %arg1 : i32 to index
    %1 = memref.load %arg2[%0] : memref<34xi32, #tpu.memory_space<smem>>
    %c0_i32 = arith.constant 0 : i32
    %c0_i32_0 = arith.constant 0 : i32
    %c0_i32_1 = arith.constant 0 : i32
    return %1, %c0_i32, %c0_i32_0 : i32, i32, i32
  }
  func.func @transform_5(%arg0: i32, %arg1: i32, %arg2: memref<34xi32, #tpu.memory_space<smem>>, %arg3: memref<34xi32, #tpu.memory_space<smem>>) -> (i32, i32) {
    %c0_i32 = arith.constant 0 : i32
    %c0_i32_0 = arith.constant 0 : i32
    return %c0_i32, %arg1 : i32, i32
  }
  func.func @transform_6(%arg0: i32, %arg1: i32, %arg2: memref<34xi32, #tpu.memory_space<smem>>, %arg3: memref<34xi32, #tpu.memory_space<smem>>) -> (i32, i32) {
    %c0_i32 = arith.constant 0 : i32
    %c0_i32_0 = arith.constant 0 : i32
    return %c0_i32, %arg1 : i32, i32
  }
  func.func @transform_7(%arg0: i32, %arg1: i32, %arg2: memref<34xi32, #tpu.memory_space<smem>>, %arg3: memref<34xi32, #tpu.memory_space<smem>>) -> (i32, i32) {
    %c0_i32 = arith.constant 0 : i32
    return %arg0, %arg1 : i32, i32
  }
}

</mosaic_0001>

<llo_original>
// kernel: output_heads_forward.1
$region0: #{output_heads_forward.1}
  #allocation0 [shape = 'u32[]', space=smem, size = 0x4, offset = 0x4, fixed_abs, tag = 'smem constant byte address 0x4 - core index']
  #allocation1 [shape = 'u32[144,128]{1,0:T(1,128)}', space=vmem, size = 0x12000, scoped, tag = 'internal scratch']
  #allocation2 [shape = 'bf16[16,32]{1,0:T(16,128)(2,1)}', space=vmem, size = 0x1000, scoped, tag = 'scratch operand']
  #allocation3 [shape = 's32[1]{0}', space=sflag, size = 0x4, scoped, tag = 'scoped memory for output_heads_forward.1']
  #allocation4 [shape = 'u8[512]{0}', space=smem, size = 0x200, scoped, tag = 'prefetched SMEM operand 0']
  #allocation5 [shape = 'u8[512]{0}', space=smem, size = 0x200, scoped, tag = 'prefetched SMEM operand 1']
  %s0 = inlined_call_operand.vmem [shape: s32[34], index: 0, kind: input, shape index: {}]
  %s1 = inlined_call_operand.vmem [shape: s32[34], index: 1, kind: input, shape index: {}]
  %s2 = inlined_call_operand.vmem [shape: bf16[16,32], index: 2, kind: input, shape index: {}]
  %s3 = inlined_call_operand.hbm [shape: bf16[6,32,32], index: 3, kind: input, shape index: {}]
  %s4 = inlined_call_operand.vmem [shape: f32[6,1,32], index: 4, kind: input, shape index: {}]
  %s5 = inlined_call_operand.vmem [shape: f32[6,1,32], index: 5, kind: input, shape index: {}]
  %s6 = inlined_call_operand.vmem [shape: f32[6,1,32], index: 6, kind: input, shape index: {}]
  %s7 = inlined_call_operand.hbm [shape: bf16[32,8704], index: 7, kind: input, shape index: {}]
  %s8 = inlined_call_operand.hbm [shape: f32[1,8704], index: 8, kind: input, shape index: {}]
  %s9 = inlined_call_operand.vmem [shape: f32[16,8704], index: 9, kind: output, shape index: {}]
  %s10 = sld [smem:[#allocation0]]
  $region96: #{output_heads_forward.1} parent=0
    _
  %s12 = ssub.s32 1, %s10
  %s13 = scalar_select 0, %s12, %s10
  %s14 = sshll.u32 %s0, 4
  %s15 = int_to_ptr.vmem [resolvable:$true] %s14
  %17 = dma.vmem_to_smem %s15, 16, [#allocation4], [#allocation3]
  %s18 = sshll.u32 %s1, 4
  %s19 = int_to_ptr.vmem [resolvable:$true] %s18
  %21 = dma.vmem_to_smem %s19, 16, [#allocation5], [#allocation3]
  %22 = dma.done [#allocation3], 32
  %23 = sfence
  $region1: #{output_heads_forward.1} parent=0
    #allocation6 [shape = 'u8[16384]{0}', space=vmem, size = 0x4000, scoped, tag = 'input window, operand 3']
    #allocation7 [shape = 's32[2]{0}', space=sflag, size = 0x8, scoped, tag = 'scoped memory for output_heads_forward.1']
    #allocation8 [shape = 'u8[32768]{0}', space=vmem, size = 0x8000, scoped, tag = 'input window, operand 7']
    #allocation9 [shape = 's32[2]{0}', space=sflag, size = 0x8, scoped, tag = 'scoped memory for output_heads_forward.1']
    #allocation10 [shape = 'u8[2048]{0}', space=vmem, size = 0x800, scoped, tag = 'input window, operand 8']
    #allocation11 [shape = 'u8[32768]{0}', space=vmem, size = 0x8000, scoped, tag = 'output window, operand 0']
    %24 = vsyncpa [#allocation7], 0
    %s25 = scalar_lea.sflag [#allocation7], 1
    %26 = vsyncpa %s25, 0
    %27 = vsyncpa [#allocation9], 0
    %s28 = scalar_lea.sflag [#allocation9], 1
    %29 = vsyncpa %s28, 0
    loop: start=0, step=1, limit=36
    $region2: #{output_heads_forward.1} parent=1 // loop_pre_header
      _
    $region3: #{output_heads_forward.1} parent=1 // loop_header
      %s31 = sphi 0, %s35
      %p32 = scmp.ge.s32.totalorder %s31, 36
      %s38 = sphi 0, %s50
      %s39 = sphi 0, %s46
      %s40 = sphi 0, %s38
      %s41 = sphi 0, %s39
      %s42 = sphi 0, %s40
      %s43 = sphi 0, %s41
      %s53 = sphi 0, %s55
      %s56 = sphi 0, %s53
      %s57 = sphi 0, %s56
      %s73 = sphi 0, %s57
      %s81 = sphi 0, %s83
      %s84 = sphi 0, %s81
      %s85 = sphi 0, %s84
      %s101 = sphi 0, %s85
      %s109 = sphi 0, %s111
      %s112 = sphi 0, %s109
      %s113 = sphi 0, %s112
      %s129 = sphi 0, %s113
      %s137 = sphi 0, %s139
      %s140 = sphi 0, %s137
      %s141 = sphi 0, %s140
      %s157 = sphi 0, %s141
      %s165 = sphi 0, %s167
      %s168 = sphi 0, %s165
      %s169 = sphi 0, %s168
      %s185 = sphi 0, %s169
      %s191 = sphi 0, %s193
      %s194 = sphi 0, %s191
      %s195 = sphi 0, %s194
      %s211 = sphi 0, %s195
      %s217 = sphi 0, %s219
      %s220 = sphi 0, %s217
      %s221 = sphi 0, %s220
      %s237 = sphi 0, %s221
      %s245 = sphi 0, %s247
      %s248 = sphi 0, %s245
      %s249 = sphi 0, %s248
      %s265 = sphi 0, %s249
    $region4: #{output_heads_forward.1} parent=1 // loop_header_branch
      %34 = sbr.rel (%p32) target = $region8
    $region5: #{output_heads_forward.1} parent=1 // loop_body
      %s36 = ssub.s32 %s31, 1
      %s37 = ssub.s32 %s31, 2
      %s44 = sadd.s32 1, %s39
      %p45 = scmp.ge.s32.totalorder %s44, 34
      %s46 = scalar_select %p45, 0, %s44
      %s47 = sadd.s32 1, %s38
      %s48 = scalar_select %p45, %s47, %s38
      %p49 = scmp.ge.s32.totalorder %s48, 1
      %s50 = scalar_select %p49, 0, %s48
      %s51 = ssub.s32 %s38, %s50
      %p52 = scmp.eq.s32.totalorder %s51, 0
      %s54 = sadd.s32 %s53, 1
      %s55 = scalar_select %p52, %s53, %s54
      %p58 = pneg %p52
      %p59 = scmp.eq.s32.totalorder %s31, 33
      %p60 = por %p58, %p59
      %p61 = scmp.ne.s32.totalorder %s53, %s56
      %p62 = scmp.eq.s32.totalorder %s31, 0
      %p63 = por %p61, %p62
      %p64 = scmp.ne.s32.totalorder %s53, %s56
      %p65 = scmp.eq.s32.totalorder %s36, 33
      %p66 = por %p64, %p65
      %p67 = scmp.ne.s32.totalorder %s56, %s57
      %p68 = scmp.eq.s32.totalorder %s36, 0
      %p69 = por %p67, %p68
      %p70 = scmp.ne.s32.totalorder %s56, %s57
      %p71 = scmp.eq.s32.totalorder %s37, 33
      %p72 = por %p70, %p71
      %p74 = scmp.ne.s32.totalorder %s57, %s73
      %p75 = scmp.eq.s32.totalorder %s37, 0
      %p76 = por %p74, %p75
      %s77 = sld [smem:[#allocation4 + %s39]]
      %s78 = sld [smem:[#allocation4 + %s46]]
      %s79 = ssub.s32 %s77, %s78
      %p80 = scmp.eq.s32.totalorder %s79, 0
      %s82 = sadd.s32 %s81, 1
      %s83 = scalar_select %p80, %s81, %s82
      %p86 = pneg %p80
      %p87 = scmp.eq.s32.totalorder %s31, 33
      %p88 = por %p86, %p87
      %p89 = scmp.ne.s32.totalorder %s81, %s84
      %p90 = scmp.eq.s32.totalorder %s31, 0
      %p91 = por %p89, %p90
      %p92 = scmp.ne.s32.totalorder %s81, %s84
      %p93 = scmp.eq.s32.totalorder %s36, 33
      %p94 = por %p92, %p93
      %p95 = scmp.ne.s32.totalorder %s84, %s85
      %p96 = scmp.eq.s32.totalorder %s36, 0
      %p97 = por %p95, %p96
      %p98 = scmp.ne.s32.totalorder %s84, %s85
      %p99 = scmp.eq.s32.totalorder %s37, 33
      %p100 = por %p98, %p99
      %p102 = scmp.ne.s32.totalorder %s85, %s101
      %p103 = scmp.eq.s32.totalorder %s37, 0
      %p104 = por %p102, %p103
      %s105 = sld [smem:[#allocation4 + %s39]]
      %s106 = sld [smem:[#allocation4 + %s46]]
      %s107 = ssub.s32 %s105, %s106
      %p108 = scmp.eq.s32.totalorder %s107, 0
      %s110 = sadd.s32 %s109, 1
      %s111 = scalar_select %p108, %s109, %s110
      %p114 = pneg %p108
      %p115 = scmp.eq.s32.totalorder %s31, 33
      %p116 = por %p114, %p115
      %p117 = scmp.ne.s32.totalorder %s109, %s112
      %p118 = scmp.eq.s32.totalorder %s31, 0
      %p119 = por %p117, %p118
      %p120 = scmp.ne.s32.totalorder %s109, %s112
      %p121 = scmp.eq.s32.totalorder %s36, 33
      %p122 = por %p120, %p121
      %p123 = scmp.ne.s32.totalorder %s112, %s113
      %p124 = scmp.eq.s32.totalorder %s36, 0
      %p125 = por %p123, %p124
      %p126 = scmp.ne.s32.totalorder %s112, %s113
      %p127 = scmp.eq.s32.totalorder %s37, 33
      %p128 = por %p126, %p127
      %p130 = scmp.ne.s32.totalorder %s113, %s129
      %p131 = scmp.eq.s32.totalorder %s37, 0
      %p132 = por %p130, %p131
      %s133 = sld [smem:[#allocation4 + %s39]]
      %s134 = sld [smem:[#allocation4 + %s46]]
      %s135 = ssub.s32 %s133, %s134
      %p136 = scmp.eq.s32.totalorder %s135, 0
      %s138 = sadd.s32 %s137, 1
      %s139 = scalar_select %p136, %s137, %s138
      %p142 = pneg %p136
      %p143 = scmp.eq.s32.totalorder %s31, 33
      %p144 = por %p142, %p143
      %p145 = scmp.ne.s32.totalorder %s137, %s140
      %p146 = scmp.eq.s32.totalorder %s31, 0
      %p147 = por %p145, %p146
      %p148 = scmp.ne.s32.totalorder %s137, %s140
      %p149 = scmp.eq.s32.totalorder %s36, 33
      %p150 = por %p148, %p149
      %p151 = scmp.ne.s32.totalorder %s140, %s141
      %p152 = scmp.eq.s32.totalorder %s36, 0
      %p153 = por %p151, %p152
      %p154 = scmp.ne.s32.totalorder %s140, %s141
      %p155 = scmp.eq.s32.totalorder %s37, 33
      %p156 = por %p154, %p155
      %p158 = scmp.ne.s32.totalorder %s141, %s157
      %p159 = scmp.eq.s32.totalorder %s37, 0
      %p160 = por %p158, %p159
      %s161 = sld [smem:[#allocation4 + %s39]]
      %s162 = sld [smem:[#allocation4 + %s46]]
      %s163 = ssub.s32 %s161, %s162
      %p164 = scmp.eq.s32.totalorder %s163, 0
      %s166 = sadd.s32 %s165, 1
      %s167 = scalar_select %p164, %s165, %s166
      %p170 = pneg %p164
      %p171 = scmp.eq.s32.totalorder %s31, 33
      %p172 = por %p170, %p171
      %p173 = scmp.ne.s32.totalorder %s165, %s168
      %p174 = scmp.eq.s32.totalorder %s31, 0
      %p175 = por %p173, %p174
      %p176 = scmp.ne.s32.totalorder %s165, %s168
      %p177 = scmp.eq.s32.totalorder %s36, 33
      %p178 = por %p176, %p177
      %p179 = scmp.ne.s32.totalorder %s168, %s169
      %p180 = scmp.eq.s32.totalorder %s36, 0
      %p181 = por %p179, %p180
      %p182 = scmp.ne.s32.totalorder %s168, %s169
      %p183 = scmp.eq.s32.totalorder %s37, 33
      %p184 = por %p182, %p183
      %p186 = scmp.ne.s32.totalorder %s169, %s185
      %p187 = scmp.eq.s32.totalorder %s37, 0
      %p188 = por %p186, %p187
      %s189 = ssub.s32 %s39, %s46
      %p190 = scmp.eq.s32.totalorder %s189, 0
      %s192 = sadd.s32 %s191, 1
      %s193 = scalar_select %p190, %s191, %s192
      %p196 = pneg %p190
      %p197 = scmp.eq.s32.totalorder %s31, 33
      %p198 = por %p196, %p197
      %p199 = scmp.ne.s32.totalorder %s191, %s194
      %p200 = scmp.eq.s32.totalorder %s31, 0
      %p201 = por %p199, %p200
      %p202 = scmp.ne.s32.totalorder %s191, %s194
      %p203 = scmp.eq.s32.totalorder %s36, 33
      %p204 = por %p202, %p203
      %p205 = scmp.ne.s32.totalorder %s194, %s195
      %p206 = scmp.eq.s32.totalorder %s36, 0
      %p207 = por %p205, %p206
      %p208 = scmp.ne.s32.totalorder %s194, %s195
      %p209 = scmp.eq.s32.totalorder %s37, 33
      %p210 = por %p208, %p209
      %p212 = scmp.ne.s32.totalorder %s195, %s211
      %p213 = scmp.eq.s32.totalorder %s37, 0
      %p214 = por %p212, %p213
      %s215 = ssub.s32 %s39, %s46
      %p216 = scmp.eq.s32.totalorder %s215, 0
      %s218 = sadd.s32 %s217, 1
      %s219 = scalar_select %p216, %s217, %s218
      %p222 = pneg %p216
      %p223 = scmp.eq.s32.totalorder %s31, 33
      %p224 = por %p222, %p223
      %p225 = scmp.ne.s32.totalorder %s217, %s220
      %p226 = scmp.eq.s32.totalorder %s31, 0
      %p227 = por %p225, %p226
      %p228 = scmp.ne.s32.totalorder %s217, %s220
      %p229 = scmp.eq.s32.totalorder %s36, 33
      %p230 = por %p228, %p229
      %p231 = scmp.ne.s32.totalorder %s220, %s221
      %p232 = scmp.eq.s32.totalorder %s36, 0
      %p233 = por %p231, %p232
      %p234 = scmp.ne.s32.totalorder %s220, %s221
      %p235 = scmp.eq.s32.totalorder %s37, 33
      %p236 = por %p234, %p235
      %p238 = scmp.ne.s32.totalorder %s221, %s237
      %p239 = scmp.eq.s32.totalorder %s37, 0
      %p240 = por %p238, %p239
      %s241 = ssub.s32 %s38, %s50
      %s242 = ssub.s32 %s39, %s46
      %s243 = sor.u32 %s241, %s242
      %p244 = scmp.eq.s32.totalorder %s243, 0
      %s246 = sadd.s32 %s245, 1
      %s247 = scalar_select %p244, %s245, %s246
      %p250 = pneg %p244
      %p251 = scmp.eq.s32.totalorder %s31, 33
      %p252 = por %p250, %p251
      %p253 = scmp.ne.s32.totalorder %s245, %s248
      %p254 = scmp.eq.s32.totalorder %s31, 0
      %p255 = por %p253, %p254
      %p256 = scmp.ne.s32.totalorder %s245, %s248
      %p257 = scmp.eq.s32.totalorder %s36, 33
      %p258 = por %p256, %p257
      %p259 = scmp.ne.s32.totalorder %s248, %s249
      %p260 = scmp.eq.s32.totalorder %s36, 0
      %p261 = por %p259, %p260
      %p262 = scmp.ne.s32.totalorder %s248, %s249
      %p263 = scmp.eq.s32.totalorder %s37, 33
      %p264 = por %p262, %p263
      %p266 = scmp.ne.s32.totalorder %s249, %s265
      %p267 = scmp.eq.s32.totalorder %s37, 0
      %p268 = por %p266, %p267
      %p269 = scmp.le.s32.totalorder 1, %s31
      %p270 = scmp.lt.s32.totalorder %s31, 35
      %p271 = pnand %p269, %p270
      %p272 = pneg %p271
      // Predicated region
      $region9: #{output_heads_forward.1} parent=5 // pred_check
        _
      $region10: #{output_heads_forward.1} parent=5 // pred_check_branch
        %274 = sbr.rel (%p271) target = $region12
      $region11: #{output_heads_forward.1} parent=5 // pred_region
        %s275 = ssub.s32 %s31, 1
        // Predicated region
        $region13: #{output_heads_forward.1} parent=11 // pred_check
          %p276 = pneg %p69
        $region14: #{output_heads_forward.1} parent=11 // pred_check_branch
          %278 = sbr.rel (%p276) target = $region16
        $region15: #{output_heads_forward.1} parent=11 // pred_region
          %s279 = smul.u32 2, %s40
          %p280 = scmp.lt.s32.totalorder %s279, 1
          %s281 = scalar_select %p280, %s279, 1
          %s282 = smul.addr %s281, 4
          %s283 = scalar_lea.vmem %s2, %s282
          %s284 = smul.u32 2, %s40
        $region16: #{output_heads_forward.1} parent=11 // pred_fallthru
          _
      $region12: #{output_heads_forward.1} parent=5 // pred_fallthru
        _
      %p285 = scmp.lt.s32.totalorder %s31, 34
      // Predicated region
      $region17: #{output_heads_forward.1} parent=5 // pred_check
        %p286 = pneg %p285
      $region18: #{output_heads_forward.1} parent=5 // pred_check_branch
        %288 = sbr.rel (%p286) target = $region20
      $region19: #{output_heads_forward.1} parent=5 // pred_region
        // Predicated region
        $region21: #{output_heads_forward.1} parent=19 // pred_check
          %p289 = pneg %p91
        $region22: #{output_heads_forward.1} parent=19 // pred_check_branch
          %291 = sbr.rel (%p289) target = $region24
        $region23: #{output_heads_forward.1} parent=19 // pred_region
          %s292 = sand.u32 %s81, 1
          %s293 = scalar_lea.sflag [#allocation7], %s292
          %s294 = sand.u32 %s81, 1
          %s295 = smul.addr %s294, 16
          %s296 = scalar_lea.vmem [#allocation6], %s295
          %s297 = sld [smem:[#allocation4 + %s39]]
          %s299 = ssub.s32 256, 256
          %300 = vsyncadd %s293, %s299
          %s301 = smul.addr %s297, 4
          %s302 = smul.addr %s301, 64
          %s303 = scalar_lea.hbm %s3, %s302
          %s304 = sshll.u32 %s296, 4
          %s305 = int_to_ptr.vmem [resolvable:$true] %s304
          %310 = dma.hbm_to_vmem [thread:$0]  %s303, 256, %s305, %s293, 64, 64, 4
        $region24: #{output_heads_forward.1} parent=19 // pred_fallthru
          _
        // Predicated region
        $region25: #{output_heads_forward.1} parent=19 // pred_check
          %p311 = pneg %p119
        $region26: #{output_heads_forward.1} parent=19 // pred_check_branch
          %313 = sbr.rel (%p311) target = $region28
        $region27: #{output_heads_forward.1} parent=19 // pred_region
          %s314 = sld [smem:[#allocation4 + %s39]]
          %p315 = scmp.lt.s32.totalorder %s314, 5
          %s316 = scalar_select %p315, %s314, 5
          %s317 = scalar_lea.vmem %s4, %s316
          %s318 = sld [smem:[#allocation4 + %s39]]
        $region28: #{output_heads_forward.1} parent=19 // pred_fallthru
          _
        // Predicated region
        $region29: #{output_heads_forward.1} parent=19 // pred_check
          %p319 = pneg %p147
        $region30: #{output_heads_forward.1} parent=19 // pred_check_branch
          %321 = sbr.rel (%p319) target = $region32
        $region31: #{output_heads_forward.1} parent=19 // pred_region
          %s322 = sld [smem:[#allocation4 + %s39]]
          %p323 = scmp.lt.s32.totalorder %s322, 5
          %s324 = scalar_select %p323, %s322, 5
          %s325 = scalar_lea.vmem %s5, %s324
          %s326 = sld [smem:[#allocation4 + %s39]]
        $region32: #{output_heads_forward.1} parent=19 // pred_fallthru
          _
        // Predicated region
        $region33: #{output_heads_forward.1} parent=19 // pred_check
          %p327 = pneg %p175
        $region34: #{output_heads_forward.1} parent=19 // pred_check_branch
          %329 = sbr.rel (%p327) target = $region36
        $region35: #{output_heads_forward.1} parent=19 // pred_region
          %s330 = sld [smem:[#allocation4 + %s39]]
          %p331 = scmp.lt.s32.totalorder %s330, 5
          %s332 = scalar_select %p331, %s330, 5
          %s333 = scalar_lea.vmem %s6, %s332
          %s334 = sld [smem:[#allocation4 + %s39]]
        $region36: #{output_heads_forward.1} parent=19 // pred_fallthru
          _
        // Predicated region
        $region37: #{output_heads_forward.1} parent=19 // pred_check
          %p335 = pneg %p201
        $region38: #{output_heads_forward.1} parent=19 // pred_check_branch
          %337 = sbr.rel (%p335) target = $region40
        $region39: #{output_heads_forward.1} parent=19 // pred_region
          %s338 = sand.u32 %s31, 1
          %s339 = scalar_lea.sflag [#allocation9], %s338
          %s340 = sand.u32 %s191, 1
          %s341 = smul.addr %s340, 32
          %s342 = scalar_lea.vmem [#allocation8], %s341
          %s343 = smul.u32 2, %s39
          %s345 = ssub.s32 512, 512
          %346 = vsyncadd %s339, %s345
          %s347 = smul.addr %s343, 64
          %s348 = scalar_lea.hbm %s7, %s347
          %s349 = sshll.u32 %s342, 4
          %s350 = int_to_ptr.vmem [resolvable:$true] %s349
          %355 = dma.hbm_to_vmem [thread:$0]  %s348, 512, %s350, %s339, 4352, 128, 8
        $region40: #{output_heads_forward.1} parent=19 // pred_fallthru
          _
        // Predicated region
        $region41: #{output_heads_forward.1} parent=19 // pred_check
          %p356 = pneg %p227
        $region42: #{output_heads_forward.1} parent=19 // pred_check_branch
          %358 = sbr.rel (%p356) target = $region44
        $region43: #{output_heads_forward.1} parent=19 // pred_region
          %s359 = sand.u32 %s31, 1
          %s360 = scalar_lea.sflag [#allocation9], %s359
          %s361 = sand.u32 %s217, 1
          %s362 = smul.addr %s361, 2
          %s363 = scalar_lea.vmem [#allocation10], %s362
          %s364 = smul.u32 2, %s39
          %s366 = ssub.s32 32, 32
          %367 = vsyncadd %s360, %s366
          %s368 = smul.addr %s364, 16
          %s369 = scalar_lea.hbm %s8, %s368
          %s371 = sshll.u32 %s363, 4
          %s372 = int_to_ptr.vmem [resolvable:$true] %s371
          %374 = dma.hbm_to_vmem [thread:$0]  %s369, 32, %s372, %s360
        $region44: #{output_heads_forward.1} parent=19 // pred_fallthru
          _
      $region20: #{output_heads_forward.1} parent=5 // pred_fallthru
        _
      %p375 = scmp.le.s32.totalorder 1, %s31
      %p376 = scmp.lt.s32.totalorder %s31, 35
      %p377 = pnand %p375, %p376
      %p378 = pneg %p377
      // Predicated region
      $region45: #{output_heads_forward.1} parent=5 // pred_check
        _
      $region46: #{output_heads_forward.1} parent=5 // pred_check_branch
        %380 = sbr.rel (%p377) target = $region48
      $region47: #{output_heads_forward.1} parent=5 // pred_region
        %s381 = ssub.s32 %s31, 1
        %s382 = sand.u32 %s84, 1
        %s383 = scalar_lea.sflag [#allocation7], %s382
        %s384 = sand.u32 %s84, 1
        %s385 = smul.addr %s384, 16
        %s386 = scalar_lea.vmem [#allocation6], %s385
        // Predicated region
        $region49: #{output_heads_forward.1} parent=47 // pred_check
          %p387 = pneg %p97
        $region50: #{output_heads_forward.1} parent=47 // pred_check_branch
          %389 = sbr.rel (%p387) target = $region52
        $region51: #{output_heads_forward.1} parent=47 // pred_region
          %390 = dma.done %s383, 256
        $region52: #{output_heads_forward.1} parent=47 // pred_fallthru
          _
        %s391 = sand.u32 %s36, 1
        %s392 = scalar_lea.sflag [#allocation9], %s391
        %s393 = sand.u32 %s194, 1
        %s394 = smul.addr %s393, 32
        %s395 = scalar_lea.vmem [#allocation8], %s394
        // Predicated region
        $region53: #{output_heads_forward.1} parent=47 // pred_check
          %p396 = pneg %p207
        $region54: #{output_heads_forward.1} parent=47 // pred_check_branch
          %398 = sbr.rel (%p396) target = $region56
        $region55: #{output_heads_forward.1} parent=47 // pred_region
          %399 = dma.done %s392, 512
        $region56: #{output_heads_forward.1} parent=47 // pred_fallthru
          _
        %s400 = sand.u32 %s36, 1
        %s401 = scalar_lea.sflag [#allocation9], %s400
        %s402 = sand.u32 %s220, 1
        %s403 = smul.addr %s402, 2
        %s404 = scalar_lea.vmem [#allocation10], %s403
        // Predicated region
        $region57: #{output_heads_forward.1} parent=47 // pred_check
          %p405 = pneg %p233
        $region58: #{output_heads_forward.1} parent=47 // pred_check_branch
          %407 = sbr.rel (%p405) target = $region60
        $region59: #{output_heads_forward.1} parent=47 // pred_region
          %408 = dma.done %s401, 32
        $region60: #{output_heads_forward.1} parent=47 // pred_fallthru
          _
        %s409 = smul.u32 2, %s40
        %p410 = scmp.lt.s32.totalorder %s409, 1
        %s411 = scalar_select %p410, %s409, 1
        %s412 = smul.addr %s411, 4
        %s413 = scalar_lea.vmem %s2, %s412
        %p414 = pneg %p69
        %p415 = pneg %p66
        %s416 = sand.u32 %s84, 1
        %s417 = scalar_lea.sflag [#allocation7], %s416
        %s418 = sand.u32 %s84, 1
        %s419 = smul.addr %s418, 16
        %s420 = scalar_lea.vmem [#allocation6], %s419
        %p421 = pneg %p97
        %p422 = pneg %p94
        %s423 = sld [smem:[#allocation4 + %s41]]
        %p424 = scmp.lt.s32.totalorder %s423, 5
        %s425 = scalar_select %p424, %s423, 5
        %s426 = scalar_lea.vmem %s4, %s425
        %p427 = pneg %p125
        %p428 = pneg %p122
        %s429 = sld [smem:[#allocation4 + %s41]]
        %p430 = scmp.lt.s32.totalorder %s429, 5
        %s431 = scalar_select %p430, %s429, 5
        %s432 = scalar_lea.vmem %s5, %s431
        %p433 = pneg %p153
        %p434 = pneg %p150
        %s435 = sld [smem:[#allocation4 + %s41]]
        %p436 = scmp.lt.s32.totalorder %s435, 5
        %s437 = scalar_select %p436, %s435, 5
        %s438 = scalar_lea.vmem %s6, %s437
        %p439 = pneg %p181
        %p440 = pneg %p178
        %s441 = sand.u32 %s36, 1
        %s442 = scalar_lea.sflag [#allocation9], %s441
        %s443 = sand.u32 %s194, 1
        %s444 = smul.addr %s443, 32
        %s445 = scalar_lea.vmem [#allocation8], %s444
        %p446 = pneg %p207
        %p447 = pneg %p204
        %s448 = sand.u32 %s36, 1
        %s449 = scalar_lea.sflag [#allocation9], %s448
        %s450 = sand.u32 %s220, 1
        %s451 = smul.addr %s450, 2
        %s452 = scalar_lea.vmem [#allocation10], %s451
        %p453 = pneg %p233
        %p454 = pneg %p230
        %p455 = pneg %p261
        %p456 = pneg %p258
        %s457 = sand.u32 %s248, 1
        %s458 = sand.u32 %s248, 1
        %s459 = smul.addr %s458, 32
        %s460 = scalar_lea.vmem [#allocation11], %s459
        %s461 = smul.u32 2, %s40
        %p462 = scmp.lt.s32.totalorder %s461, 1
        %s463 = scalar_select %p462, %s461, 1
        %s464 = smul.addr %s463, 4
        %s465 = scalar_lea.vmem %s2, %s464
        %s466 = smul.u32 2, %s40
        %s467 = sld [smem:[#allocation4 + %s41]]
        %s468 = sld [smem:[#allocation4 + %s41]]
        %p469 = scmp.lt.s32.totalorder %s468, 5
        %s470 = scalar_select %p469, %s468, 5
        %s471 = scalar_lea.vmem %s4, %s470
        %s472 = sld [smem:[#allocation4 + %s41]]
        %s473 = sld [smem:[#allocation4 + %s41]]
        %p474 = scmp.lt.s32.totalorder %s473, 5
        %s475 = scalar_select %p474, %s473, 5
        %s476 = scalar_lea.vmem %s5, %s475
        %s477 = sld [smem:[#allocation4 + %s41]]
        %s478 = sld [smem:[#allocation4 + %s41]]
        %p479 = scmp.lt.s32.totalorder %s478, 5
        %s480 = scalar_select %p479, %s478, 5
        %s481 = scalar_lea.vmem %s6, %s480
        %s482 = sld [smem:[#allocation4 + %s41]]
        %s483 = smul.u32 2, %s41
        %s484 = smul.u32 2, %s41
        %s485 = smul.u32 2, %s40
        %s486 = smul.u32 2, %s41
        %s488 = sld [smem:[#allocation5 + %s41]]
        %p489 = scmp.eq.s32.totalorder %s488, 1
        // Predicated region
        $region61: #{output_heads_forward.1} parent=47 // pred_check
          %p490 = pneg %p489
        $region62: #{output_heads_forward.1} parent=47 // pred_check_branch
          %492 = sbr.rel (%p490) target = $region64
        $region63: #{output_heads_forward.1} parent=47 // pred_region
          %v493 = vld [vmem:[%s465] sm:$0xf]
          %v494 = vld [vmem:[%s465 + $0x4] sm:$0xf]
          %v495 = vld [vmem:[%s386] sm:$0xf]
          %v496 = vld [vmem:[%s386 + $0x4] sm:$0xf]
          %v497 = vld [vmem:[%s386 + $0x8] sm:$0xf]
          %v498 = vld [vmem:[%s386 + $0xc] sm:$0xf]
          %v499 = vld [vmem:[%s471] sm:$0x1]
          %v501 = vlaneseq
          %v502 = vshrl.u32 %v501, 7
          %v503 = vsub.s32 0, %v502
          %v504 = vrot.slane %v499, %v503
          %v508 = vunpack.c.l.b16 %v493
          %v509 = vunpack.c.l.b16 %v494
          %v510 = vpack.c.b16 %v509, %v508
          %v515 = vunpack.c.l.b16 %v495
          %v516 = vunpack.c.l.b16 %v496
          %v517 = vunpack.c.l.b16 %v497
          %v518 = vunpack.c.l.b16 %v498
          %v519 = vpack.c.b16 %v516, %v515
          %v520 = vpack.c.b16 %v518, %v517
          %vm523 = vcmask 261120
          %v525 = vsel %vm523, %v510, 0
          %527 = vmatprep.subr.bf16.mxu0 0
          %528 = vmatpush1.bf16.msra.mxu0 %v519
          %529 = vmatprep.subr.bf16.mxu0 0
          %530 = vmatpush1.bf16.msra.mxu0 %v520
          %531 = vmatprep.subr.bf16.mxu0 0
          %532 = vmatpush1.bf16.msra.mxu0 0
          %533 = vmatprep.subr.bf16.mxu0 0
          %534 = vmatpush1.bf16.msra.mxu0 0
          %535 = vmatprep.subr.bf16.mxu0 0
          %536 = vmatpush1.bf16.msra.mxu0 0
          %537 = vmatprep.subr.bf16.mxu0 0
          %538 = vmatpush1.bf16.msra.mxu0 0
          %539 = vmatprep.subr.bf16.mxu0 0
          %540 = vmatpush1.bf16.msra.mxu0 0
          %541 = vmatprep.subr.bf16.mxu0 0
          %542 = vmatpush1.bf16.msra.mxu0 0
          %543 = vmatprep.subr.bf16.mxu0 0
          %544 = vmatpush1.bf16.msra.mxu0 0
          %545 = vmatprep.subr.bf16.mxu0 0
          %546 = vmatpush1.bf16.msra.mxu0 0
          %547 = vmatprep.subr.bf16.mxu0 0
          %548 = vmatpush1.bf16.msra.mxu0 0
          %549 = vmatprep.subr.bf16.mxu0 0
          %550 = vmatpush1.bf16.msra.mxu0 0
          %551 = vmatprep.subr.bf16.mxu0 0
          %552 = vmatpush1.bf16.msra.mxu0 0
          %553 = vmatprep.subr.bf16.mxu0 0
          %554 = vmatpush1.bf16.msra.mxu0 0
          %555 = vmatprep.subr.bf16.mxu0 0
          %556 = vmatpush1.bf16.msra.mxu0 0
          %557 = vmatprep.subr.bf16.mxu0 0
          %558 = vmatpush1.bf16.msra.mxu0 0
          %559 = vmatprep.mubr.bf16.mxu0 0
          %560 = vmatmul.mubr.bf16.gmra.mrb[0].mxu0 %v525
          %v561 = vpop.f32.mrb[0].mxu0
          %v562 = vadd.f32 %v504, %v561
          %v563 = vpop.f32.mrb[0].mxu0
          %v564 = vpop.f32.mrb[0].mxu0
          %v565 = vadd.f32 %v504, %v564
          %v566 = vpop.f32.mrb[0].mxu0
          %567 = vdwg.mxu0
          %v568 = vmul.f32 %v562, 0.5
          %v569 = vmul.f32 %v565, 0.5
          %v570 = vmul.f32 %v562, 0.70710677
          %v571 = vmul.f32 %v565, 0.70710677
          %v572 = verf.f32.pop %v570
          %v573 = verf.f32.pop %v571
          %v574 = vadd.f32 %v572, 1.0
          %v575 = vadd.f32 %v573, 1.0
          %v576 = vmul.f32 %v568, %v574
          %v577 = vmul.f32 %v569, %v575
          %v578 = vsel %vm523, %v576, 0.0
          %579 = vadd.xlane.f32.xlu0 %v578
          %v580 = vpop.xlane.xlu0 %579
          %v581 = vsel %vm523, %v577, 0.0
          %582 = vadd.xlane.f32.xlu0 %v581
          %v583 = vpop.xlane.xlu0 %582
          %v584 = vrcp.pop 32.0
          %v585 = vmul.f32 %v580, %v584
          %v586 = vmul.f32 %v583, %v584
          %v587 = vmul.f32 %v576, %v576
          %v588 = vmul.f32 %v577, %v577
          %v589 = vsel %vm523, %v587, 0.0
          %590 = vadd.xlane.f32.xlu0 %v589
          %v591 = vpop.xlane.xlu0 %590
          %v592 = vsel %vm523, %v588, 0.0
          %593 = vadd.xlane.f32.xlu0 %v592
          %v594 = vpop.xlane.xlu0 %593
          %v595 = vmul.f32 %v591, %v584
          %v596 = vmul.f32 %v594, %v584
          %v597 = vmul.f32 %v585, %v585
          %v598 = vmul.f32 %v586, %v586
          %v599 = vsub.f32 %v595, %v597
          %v600 = vsub.f32 %v596, %v598
          %v601 = vmax.f32 %v599, 0.0
          %v602 = vmax.f32 %v600, 0.0
          %v603 = vsub.f32 %v576, %v585
          %v604 = vsub.f32 %v577, %v586
          %v605 = vadd.f32 %v601, 1e-05
          %v606 = vadd.f32 %v602, 1e-05
          %v607 = vrsqrt.pop %v605
          %v608 = vrsqrt.pop %v606
          %v609 = vmul.f32 %v603, %v607
          %v610 = vmul.f32 %v604, %v608
          %v611 = vld [vmem:[%s476] sm:$0x1]
          %v613 = vlaneseq
          %v614 = vshrl.u32 %v613, 7
          %v615 = vsub.s32 0, %v614
          %v616 = vrot.slane %v611, %v615
          %v618 = vmul.f32 %v609, %v616
          %v619 = vmul.f32 %v610, %v616
          %v620 = vld [vmem:[%s481] sm:$0x1]
          %v622 = vlaneseq
          %v623 = vshrl.u32 %v622, 7
          %v624 = vsub.s32 0, %v623
          %v625 = vrot.slane %v620, %v624
          %v627 = vadd.f32 %v618, %v625
          %v628 = vadd.f32 %v619, %v625
          %v629 = vpack.c.bf16 %v628, %v627
          %630 = vst.msk [vmem:[#allocation2] sm:$0xff] %vm523, %v629
        $region64: #{output_heads_forward.1} parent=47 // pred_fallthru
          _
        %v631 = vld [vmem:[#allocation2] sm:$0xff]
        %v632 = vld [vmem:[%s395] sm:$0xff]
        %v633 = vld [vmem:[%s395 + $0x8] sm:$0xff]
        %v634 = vld [vmem:[%s395 + $0x10] sm:$0xff]
        %v635 = vld [vmem:[%s395 + $0x18] sm:$0xff]
        %v636 = vld [vmem:[%s404] sm:$0x3]
        %v638 = vlaneseq
        %v639 = vshrl.u32 %v638, 7
        %v640 = vsub.s32 0, %v639
        %v641 = vrot.slane %v636, %v640
        %v642 = vlaneseq
        %v643 = vshrl.u32 %v642, 7
        %v644 = vsub.s32 1, %v643
        %v645 = vrot.slane %v636, %v644
        %v652 = vunpack.c.l.b16 %v632
        %v653 = vunpack.c.h.b16 %v632
        %v654 = vunpack.c.l.b16 %v633
        %v655 = vunpack.c.h.b16 %v633
        %v656 = vunpack.c.l.b16 %v634
        %v657 = vunpack.c.h.b16 %v634
        %v658 = vunpack.c.l.b16 %v635
        %v659 = vunpack.c.h.b16 %v635
        %v660 = vpack.c.b16 %v654, %v652
        %v661 = vpack.c.b16 %v655, %v653
        %v662 = vpack.c.b16 %v658, %v656
        %v663 = vpack.c.b16 %v659, %v657
        %vm668 = vcmask 261120
        %v670 = vsel %vm668, %v631, 0
        %672 = vmatprep.subr.bf16.mxu0 %v661
        %673 = vmatpush1.bf16.msra.mxu0 %v660
        %674 = vmatprep.subr.bf16.mxu0 %v663
        %675 = vmatpush1.bf16.msra.mxu0 %v662
        %676 = vmatprep.subr.bf16.mxu0 0
        %677 = vmatpush1.bf16.msra.mxu0 0
        %678 = vmatprep.subr.bf16.mxu0 0
        %679 = vmatpush1.bf16.msra.mxu0 0
        %680 = vmatprep.subr.bf16.mxu0 0
        %681 = vmatpush1.bf16.msra.mxu0 0
        %682 = vmatprep.subr.bf16.mxu0 0
        %683 = vmatpush1.bf16.msra.mxu0 0
        %684 = vmatprep.subr.bf16.mxu0 0
        %685 = vmatpush1.bf16.msra.mxu0 0
        %686 = vmatprep.subr.bf16.mxu0 0
        %687 = vmatpush1.bf16.msra.mxu0 0
        %688 = vmatprep.subr.bf16.mxu0 0
        %689 = vmatpush1.bf16.msra.mxu0 0
        %690 = vmatprep.subr.bf16.mxu0 0
        %691 = vmatpush1.bf16.msra.mxu0 0
        %692 = vmatprep.subr.bf16.mxu0 0
        %693 = vmatpush1.bf16.msra.mxu0 0
        %694 = vmatprep.subr.bf16.mxu0 0
        %695 = vmatpush1.bf16.msra.mxu0 0
        %696 = vmatprep.subr.bf16.mxu0 0
        %697 = vmatpush1.bf16.msra.mxu0 0
        %698 = vmatprep.subr.bf16.mxu0 0
        %699 = vmatpush1.bf16.msra.mxu0 0
        %700 = vmatprep.subr.bf16.mxu0 0
        %701 = vmatpush1.bf16.msra.mxu0 0
        %702 = vmatprep.subr.bf16.mxu0 0
        %703 = vmatpush1.bf16.msra.mxu0 0
        %704 = vmatprep.mubr.bf16.mxu0 0
        %705 = vmatmul.mubr.bf16.gmra.mrb[0].mxu0 %v670
        %v706 = vpop.f32.mrb[0].mxu0
        %v707 = vadd.f32 %v641, %v706
        %v708 = vpop.f32.mrb[0].mxu0
        %v709 = vadd.f32 %v645, %v708
        %v710 = vpop.f32.mrb[0].mxu0
        %v711 = vadd.f32 %v641, %v710
        %v712 = vpop.f32.mrb[0].mxu0
        %v713 = vadd.f32 %v645, %v712
        %714 = vdwg.mxu0
        %715 = vst [vmem:[%s460] sm:$0xff] %v707
        %716 = vst [vmem:[%s460 + $0x8] sm:$0xff] %v709
        %717 = vst [vmem:[%s460 + $0x10] sm:$0xff] %v711
        %718 = vst [vmem:[%s460 + $0x18] sm:$0xff] %v713
        %s719 = sand.u32 %s248, 1
        %s720 = sand.u32 %s248, 1
        %s721 = smul.addr %s720, 32
        %s722 = scalar_lea.vmem [#allocation11], %s721
        // Predicated region
        $region65: #{output_heads_forward.1} parent=47 // pred_check
          %p723 = pneg %p258
        $region66: #{output_heads_forward.1} parent=47 // pred_check_branch
          %725 = sbr.rel (%p723) target = $region68
        $region67: #{output_heads_forward.1} parent=47 // pred_region
          %s726 = smul.u32 2, %s40
          %s727 = smul.u32 2, %s41
          %s728 = smul.addr %s726, 68
          %s729 = sadd.s32 %s727, %s728
          %s730 = smul.addr %s729, 8
          %s731 = scalar_lea.vmem %s9, %s730
          // Predicated region
          $region69: #{output_heads_forward.1} parent=67 // pred_check
            _
          $region70: #{output_heads_forward.1} parent=67 // pred_check_branch
            %733 = sbr.rel (0) target = $region72
          $region71: #{output_heads_forward.1} parent=67 // pred_region
            // Predicated region
            $region73: #{output_heads_forward.1} parent=71 // pred_check
              _
            $region74: #{output_heads_forward.1} parent=71 // pred_check_branch
              %735 = sbr.rel (0) target = $region76
            $region75: #{output_heads_forward.1} parent=71 // pred_region
              loop: start=0, step=1, limit=1
              $region77: #{output_heads_forward.1} parent=75 // loop_pre_header
                _
              $region78: #{output_heads_forward.1} parent=75 // loop_header
                %s737 = sphi 0, %s741
                %p738 = scmp.ge.s32.totalorder %s737, 1
                %s742 = sphi %s722, %s722
                %s743 = sphi %s731, %s731
              $region79: #{output_heads_forward.1} parent=75 // loop_header_branch
                %740 = sbr.rel (%p738) target = $region83
              $region80: #{output_heads_forward.1} parent=75 // loop_body
                %v744 = vld [vmem:[%s742] sm:$0xff]
                %745 = vst [vmem:[%s743] sm:$0xff] %v744
                %v746 = vld [vmem:[%s742 + $0x8] sm:$0xff]
                %747 = vst [vmem:[%s743 + $0x8] sm:$0xff] %v746
                %v748 = vld [vmem:[%s742 + $0x10] sm:$0xff]
                %749 = vst [vmem:[%s743 + $0x220] sm:$0xff] %v748
                %v750 = vld [vmem:[%s742 + $0x18] sm:$0xff]
                %751 = vst [vmem:[%s743 + $0x228] sm:$0xff] %v750
              $region81: #{output_heads_forward.1} parent=75 // loop_footer
                %s741 = sadd.s32 1, %s737
              $region82: #{output_heads_forward.1} parent=75 // loop_footer_branch
                %736 = sbr.rel target = $region78
              $region83: #{output_heads_forward.1} parent=75 // loop_exit
                _
            $region76: #{output_heads_forward.1} parent=71 // pred_fallthru
              _
            // Predicated region
            $region84: #{output_heads_forward.1} parent=71 // pred_check
              _
            $region85: #{output_heads_forward.1} parent=71 // pred_check_branch
              %753 = sbr.rel target = $region87
            $region86: #{output_heads_forward.1} parent=71 // pred_region
              _
            $region87: #{output_heads_forward.1} parent=71 // pred_fallthru
              _
          $region72: #{output_heads_forward.1} parent=67 // pred_fallthru
            _
          %754 = vnop
        $region68: #{output_heads_forward.1} parent=47 // pred_fallthru
          _
      $region48: #{output_heads_forward.1} parent=5 // pred_fallthru
        _
      %p755 = scmp.le.s32.totalorder 2, %s31
      // Predicated region
      $region88: #{output_heads_forward.1} parent=5 // pred_check
        %p756 = pneg %p755
      $region89: #{output_heads_forward.1} parent=5 // pred_check_branch
        %758 = sbr.rel (%p756) target = $region91
      $region90: #{output_heads_forward.1} parent=5 // pred_region
        %s759 = ssub.s32 %s31, 2
        // Predicated region
        $region92: #{output_heads_forward.1} parent=90 // pred_check
          %p760 = pneg %p264
        $region93: #{output_heads_forward.1} parent=90 // pred_check_branch
          %762 = sbr.rel (%p760) target = $region95
        $region94: #{output_heads_forward.1} parent=90 // pred_region
          %s763 = sand.u32 %s249, 1
          %s764 = sand.u32 %s249, 1
          %s765 = smul.addr %s764, 32
          %s766 = scalar_lea.vmem [#allocation11], %s765
        $region95: #{output_heads_forward.1} parent=90 // pred_fallthru
          _
      $region91: #{output_heads_forward.1} parent=5 // pred_fallthru
        _
    $region6: #{output_heads_forward.1} parent=1 // loop_footer
      %s35 = sadd.s32 1, %s31
    $region7: #{output_heads_forward.1} parent=1 // loop_footer_branch
      %30 = sbr.rel target = $region3
    $region8: #{output_heads_forward.1} parent=1 // loop_exit
      _
    %767 = vsyncpa [#allocation7], 1
    %s768 = scalar_lea.sflag [#allocation7], 1
    %769 = vsyncpa %s768, 1
    %770 = vsyncpa [#allocation9], 1
    %s771 = scalar_lea.sflag [#allocation9], 1
    %772 = vsyncpa %s771, 1

</llo_original>
